<compile_context>
chip_gen: v6e
topology: v6e:2x2x1
jax: 0.10.0
libtpu: 0.0.40
codegen_flags: <defaults>
</compile_context>

<pallas_src>
import jax
import jax.numpy as jnp
from jax.experimental import pallas as pl
from jax.experimental.pallas import tpu as pltpu


# ----------------------------- constants ------------------------------------

LANE = 128        # vreg lane width
SUBLANE = 8       # vreg sublane height (f32)

# Per-array VMEM block targets.  With 3 arrays x 2 pipeline buffers the peak
# footprint stays well under the explicit limit below on every generation.
_SUM_BLOCK_BYTES = 4 * 1024 * 1024   # ~85-90% of HBM roofline for a pure add
_CAT_BLOCK_BYTES = 2 * 1024 * 1024   # per input block of the concat path

# Above v5e's 16 MiB scoped-VMEM default, below v7x's 64 MiB physical/TC.
_VMEM_LIMIT_BYTES = 48 * 1024 * 1024


# ----------------------------- helpers --------------------------------------

def _cdiv(a, b):
    return (a + b - 1) // b


def _round_up(x, m):
    return _cdiv(x, m) * m


def _largest_divisor_le(n, cap):
    """Largest divisor of n that is <= cap (n is small, e.g. a batch size)."""
    cap = max(1, min(n, cap))
    for d in range(cap, 0, -1):
        if n % d == 0:
            return d
    return 1


# ----------------------------- kernels --------------------------------------

def _sum_kernel(x1_ref, x2_ref, o_ref):
    o_ref[...] = x1_ref[...] + x2_ref[...]


def _concat_proj_kernel(x1_ref, x2_ref, w_ref, b_ref, o_ref):
    # x1/x2: (Bn, C, T) VMEM, w: (C_out, 2C) VMEM, b: (C_out, 1) VMEM,
    # o: (Bn, C_out, T) VMEM.  Spatial (T) is on the lane axis, so the tiny
    # channel contraction runs as (C_out, C) @ (C, T) per folded batch and the
    # result / store is lane-dense.  y = W1 @ x1 + W2 @ x2 + b == conv1x1(cat).
    c = x1_ref.shape[1]
    w = w_ref[...]                       # single resident weight load
    w1, w2 = w[:, :c], w[:, c:]
    bias = b_ref[...]                    # (C_out, 1), broadcasts over lanes
    for bidx in range(x1_ref.shape[0]):  # static unroll over folded batches
        acc = jnp.dot(w1, x1_ref[bidx], preferred_element_type=jnp.float32)
        acc = acc + jnp.dot(w2, x2_ref[bidx],
                            preferred_element_type=jnp.float32)
        o_ref[bidx] = (acc + bias).astype(o_ref.dtype)
    # TODO(synk): for C<=4 a VPU broadcast-MAC unroll would avoid the 2x
    # sublane padding of the MXU path; negligible here (bandwidth-bound).


# ----------------------------- wrappers -------------------------------------

def fusion_sum(x1, x2, *, donate_x1=False):
    """mode='sum': elementwise add (proj is Identity)."""
    orig_shape = x1.shape
    total = x1.size
    itemsize = jnp.dtype(x1.dtype).itemsize

    # Flat lane-dense (rows, 128) view; rows padded so blocks tile exactly.
    n128 = _cdiv(total, LANE)
    rows_per_block = max(SUBLANE, _SUM_BLOCK_BYTES // (LANE * itemsize))
    n_blocks = max(1, _cdiv(n128, rows_per_block))
    if n_blocks == 1 and n128 >= 2 * SUBLANE:
        n_blocks = 2                       # >= 2 parallel steps (v7x megacore)
    tr = _round_up(_cdiv(n128, n_blocks), SUBLANE)
    rows_p = n_blocks * tr
    padded_total = rows_p * LANE

    a = x1.reshape(-1)
    b = x2.reshape(-1)
    if padded_total != total:
        pad = padded_total - total
        a = jnp.pad(a, (0, pad))
        b = jnp.pad(b, (0, pad))
    a = a.reshape(rows_p, LANE)
    b = b.reshape(rows_p, LANE)

    out = pl.pallas_call(
        _sum_kernel,
        out_shape=jax.ShapeDtypeStruct((rows_p, LANE), x1.dtype),
        grid=(n_blocks,),
        in_specs=[
            pl.BlockSpec((tr, LANE), lambda i: (i, 0)),
            pl.BlockSpec((tr, LANE), lambda i: (i, 0)),
        ],
        out_specs=pl.BlockSpec((tr, LANE), lambda i: (i, 0)),
        # Opt-in aliasing cuts HBM traffic 3 -> 2 streams when the caller
        # donates x1; default stays functional (PyTorch does not mutate x1).
        input_output_aliases=({0: 0} if donate_x1 else {}),
        compiler_params=pltpu.CompilerParams(
            dimension_semantics=("parallel",),
            vmem_limit_bytes=_VMEM_LIMIT_BYTES),
    )(a, b)

    out = out.reshape(-1)
    if padded_total != total:
        out = out[:total]
    return out.reshape(orig_shape)


def fusion_concat(x1, x2, conv_w, conv_b):
    """mode='concat': channel concat + 1x1 conv, fused (concat never built)."""
    n, c, h, w = x1.shape
    c_out = conv_w.shape[0]
    hw = h * w
    itemsize = jnp.dtype(x1.dtype).itemsize

    # Spatial tiling: grow the lane-axis tile toward the VMEM block budget,
    # padding HW up to a multiple of 128 (and of the tile) instead of falling
    # back to one giant / non-lane-dense block.
    hw_p = _round_up(hw, LANE)
    lane_per_block = max(LANE, _CAT_BLOCK_BYTES // (c * itemsize))
    n_hw_blocks = max(1, _cdiv(hw_p, lane_per_block))
    if n * n_hw_blocks < 2 and hw_p >= 2 * LANE:
        n_hw_blocks = 2                    # >= 2 parallel steps (v7x megacore)
    hw_tile = _round_up(_cdiv(hw_p, n_hw_blocks), LANE)
    hw_pp = n_hw_blocks * hw_tile

    # Batch folding: when one spatial tile covers all of HW and blocks are
    # still far below the budget, fold several batches per grid step (keeping
    # at least 2 steps along the batch axis so both v7x cores stay busy).
    bn = 1
    if n_hw_blocks == 1 and n > 1:
        bn_by_bytes = max(1, _CAT_BLOCK_BYTES // (c * hw_pp * itemsize))
        bn = _largest_divisor_le(n, min(bn_by_bytes, max(1, n // 2)))
    n_batch_blocks = n // bn

    # Keep NCHW: only cheap metadata reshapes, no HBM-round-trip transposes.
    x1f = x1.reshape(n, c, hw)
    x2f = x2.reshape(n, c, hw)
    if hw_pp != hw:
        pad = hw_pp - hw
        x1f = jnp.pad(x1f, ((0, 0), (0, 0), (0, pad)))
        x2f = jnp.pad(x2f, ((0, 0), (0, 0), (0, pad)))

    # conv weight (C_out, 2C, 1, 1) -> fused (C_out, 2C); bias -> (C_out, 1).
    wf = conv_w.reshape(c_out, 2 * c)
    bias = conv_b.reshape(c_out, 1)

    out = pl.pallas_call(
        _concat_proj_kernel,
        out_shape=jax.ShapeDtypeStruct((n, c_out, hw_pp), x1.dtype),
        grid=(n_batch_blocks, n_hw_blocks),
        in_specs=[
            pl.BlockSpec((bn, c, hw_tile), lambda bi, ti: (bi, 0, ti)),
            pl.BlockSpec((bn, c, hw_tile), lambda bi, ti: (bi, 0, ti)),
            pl.BlockSpec((c_out, 2 * c), lambda bi, ti: (0, 0)),
            pl.BlockSpec((c_out, 1), lambda bi, ti: (0, 0)),
        ],
        out_specs=pl.BlockSpec((bn, c_out, hw_tile),
                               lambda bi, ti: (bi, 0, ti)),
        compiler_params=pltpu.CompilerParams(
            dimension_semantics=("parallel", "parallel"),
            vmem_limit_bytes=_VMEM_LIMIT_BYTES),
    )(x1f, x2f, wf, bias)

    if hw_pp != hw:
        out = out[:, :, :hw]
    return out.reshape(n, c_out, h, w)


def simple_fusion_module(x1, x2, mode, conv_w=None, conv_b=None):
    if mode == 'sum':
        return fusion_sum(x1, x2)
    elif mode == 'concat':
        return fusion_concat(x1, x2, conv_w, conv_b)
    else:
        raise ValueError(mode)


# ------------------------------- main ---------------------------------------

if __name__ == "__main__":
    key = jax.random.PRNGKey(0)
    k1, k2, kw, kb = jax.random.split(key, 4)

    N, C, H, W = 2, 4, 16, 16
    x1 = jax.random.normal(k1, (N, C, H, W), dtype=jnp.float32)
    x2 = jax.random.normal(k2, (N, C, H, W), dtype=jnp.float32)

    # deterministic synthetic parameters for the 'concat' projection:
    # nn.Conv2d(2C, C, kernel_size=1) -> weight (C, 2C, 1, 1), bias (C,)
    conv_w = jax.random.normal(kw, (C, 2 * C, 1, 1), dtype=jnp.float32) * 0.1
    conv_b = jax.random.normal(kb, (C,), dtype=jnp.float32) * 0.1

    # --- sum mode ---
    y_sum = simple_fusion_module(x1, x2, mode='sum')
    jax.block_until_ready(y_sum)
    ref_sum = x1 + x2
    assert y_sum.shape == (N, C, H, W)
    assert jnp.allclose(y_sum, ref_sum, atol=1e-6), "sum mode mismatch"

    # --- concat mode ---
    y_cat = simple_fusion_module(x1, x2, mode='concat',
                                 conv_w=conv_w, conv_b=conv_b)
    jax.block_until_ready(y_cat)
    xcat = jnp.concatenate([x1, x2], axis=1)                      # (N, 2C, H, W)
    ref_cat = jnp.einsum('oc,nchw->nohw', conv_w.reshape(C, 2 * C), xcat)
    ref_cat = ref_cat + conv_b.reshape(1, C, 1, 1)
    assert y_cat.shape == (N, C, H, W)
    assert jnp.allclose(y_cat, ref_cat, atol=1e-4), "concat mode mismatch"

    print("KERNEL_OK")
</pallas_src>

<mosaic_0001>
module attributes {stable_mosaic.version = 11 : i64} {
  func.func @_sum_kernel(%arg0: i32, %arg1: memref<8x128xf32, #tpu.memory_space<vmem>>, %arg2: memref<8x128xf32, #tpu.memory_space<vmem>>, %arg3: memref<8x128xf32, #tpu.memory_space<vmem>>) attributes {dimension_semantics = [#tpu.dimension_semantics<parallel>], iteration_bounds = array<i64: 2>, scalar_prefetch = 0 : i64, scratch_operands = 0 : i64, tpu.core_type = #tpu.core_type<tc>, window_params = [{transform_indices = @transform_0, window_bounds = array<i64: 8, 128>}, {transform_indices = @transform_1, window_bounds = array<i64: 8, 128>}, {transform_indices = @transform_2, window_bounds = array<i64: 8, 128>}]} {
    %c0 = arith.constant 0 : index
    %c0_0 = arith.constant 0 : index
    %0 = vector.load %arg1[%c0, %c0_0] : memref<8x128xf32, #tpu.memory_space<vmem>>, vector<8x128xf32>
    %c0_1 = arith.constant 0 : index
    %c0_2 = arith.constant 0 : index
    %1 = vector.load %arg2[%c0_1, %c0_2] : memref<8x128xf32, #tpu.memory_space<vmem>>, vector<8x128xf32>
    %2 = arith.addf %0, %1 : vector<8x128xf32>
    %c0_3 = arith.constant 0 : index
    %c0_4 = arith.constant 0 : index
    %3 = vector.load %arg3[%c0_3, %c0_4] : memref<8x128xf32, #tpu.memory_space<vmem>>, vector<8x128xf32>
    tpu.vector_store %arg3[%c0_3, %c0_4], %2 {strides = array<i32>} : memref<8x128xf32, #tpu.memory_space<vmem>>, vector<8x128xf32>,
    return
  }
  func.func @transform_0(%arg0: i32) -> (i32, i32) {
    %c0_i32 = arith.constant 0 : i32
    %c0_i32_0 = arith.constant 0 : i32
    return %arg0, %c0_i32 : i32, i32
  }
  func.func @transform_1(%arg0: i32) -> (i32, i32) {
    %c0_i32 = arith.constant 0 : i32
    %c0_i32_0 = arith.constant 0 : i32
    return %arg0, %c0_i32 : i32, i32
  }
  func.func @transform_2(%arg0: i32) -> (i32, i32) {
    %c0_i32 = arith.constant 0 : i32
    %c0_i32_0 = arith.constant 0 : i32
    return %arg0, %c0_i32 : i32, i32
  }
}

</mosaic_0001>

<llo_original>
// kernel: tpu_custom_call.1
$region0: #{tpu_custom_call.1}
  #allocation0 [shape = 'u32[]', space=smem, size = 0x4, offset = 0x4, fixed_abs, tag = 'smem constant byte address 0x4 - core index']
  #allocation1 [shape = 'u32[144,128]{1,0:T(1,128)}', space=vmem, size = 0x12000, scoped, tag = 'internal scratch']
  %s0 = inlined_call_operand.hbm [shape: f32[16,128], index: 0, kind: input, shape index: {}]
  %s1 = inlined_call_operand.hbm [shape: f32[16,128], index: 1, kind: input, shape index: {}]
  %s2 = inlined_call_operand.hbm [shape: f32[16,128], index: 2, kind: output, shape index: {}]
  %s3 = sld [smem:[#allocation0]]
  $region49: #{tpu_custom_call.1} parent=0
    _
  %s5 = ssub.s32 1, %s3
  %s6 = scalar_select 0, %s5, %s3
  $region1: #{tpu_custom_call.1} parent=0
    #allocation2 [shape = 'u8[8192]{0}', space=vmem, size = 0x2000, scoped, tag = 'input window, operand 0']
    #allocation3 [shape = 's32[2]{0}', space=sflag, size = 0x8, scoped, tag = 'scoped memory for tpu_custom_call.1']
    #allocation4 [shape = 's32[2]{0}', space=sflag, size = 0x8, scoped, tag = 'scoped memory for tpu_custom_call.1']
    #allocation5 [shape = 'u8[8192]{0}', space=vmem, size = 0x2000, scoped, tag = 'input window, operand 1']
    #allocation6 [shape = 's32[2]{0}', space=sflag, size = 0x8, scoped, tag = 'scoped memory for tpu_custom_call.1']
    #allocation7 [shape = 'u8[8192]{0}', space=vmem, size = 0x2000, scoped, tag = 'output window, operand 0']
    %7 = vsyncpa [#allocation3], 0
    %s8 = scalar_lea.sflag [#allocation3], 1
    %9 = vsyncpa %s8, 0
    %10 = vsyncpa [#allocation6], 0
    %s11 = scalar_lea.sflag [#allocation6], 1
    %12 = vsyncpa %s11, 0
    %13 = vsyncpa [#allocation4], 0
    %s14 = scalar_lea.sflag [#allocation4], 1
    %15 = vsyncpa %s14, 0
    loop: start=0, step=1, limit=4
    $region2: #{tpu_custom_call.1} parent=1 // loop_pre_header
      _
    $region3: #{tpu_custom_call.1} parent=1 // loop_header
      %s17 = sphi 0, %s21
      %p18 = scmp.ge.s32.totalorder %s17, 4
      %s27 = sphi 0, %s29
      %s30 = sphi 0, %s27
      %s31 = sphi 0, %s30
      %s47 = sphi 0, %s31
      %s53 = sphi 0, %s55
      %s56 = sphi 0, %s53
      %s57 = sphi 0, %s56
      %s73 = sphi 0, %s57
      %s79 = sphi 0, %s81
      %s82 = sphi 0, %s79
      %s83 = sphi 0, %s82
      %s99 = sphi 0, %s83
    $region4: #{tpu_custom_call.1} parent=1 // loop_header_branch
      %20 = sbr.rel (%p18) target = $region8
    $region5: #{tpu_custom_call.1} parent=1 // loop_body
      %s22 = ssub.s32 %s17, 1
      %s23 = ssub.s32 %s17, 2
      %s24 = sadd.s32 %s17, 1
      %s25 = ssub.s32 %s17, %s24
      %p26 = scmp.eq.s32.totalorder %s25, 0
      %s28 = sadd.s32 %s27, 1
      %s29 = scalar_select %p26, %s27, %s28
      %p32 = pneg %p26
      %p33 = scmp.eq.s32.totalorder %s17, 1
      %p34 = por %p32, %p33
      %p35 = scmp.ne.s32.totalorder %s27, %s30
      %p36 = scmp.eq.s32.totalorder %s17, 0
      %p37 = por %p35, %p36
      %p38 = scmp.ne.s32.totalorder %s27, %s30
      %p39 = scmp.eq.s32.totalorder %s22, 1
      %p40 = por %p38, %p39
      %p41 = scmp.ne.s32.totalorder %s30, %s31
      %p42 = scmp.eq.s32.totalorder %s22, 0
      %p43 = por %p41, %p42
      %p44 = scmp.ne.s32.totalorder %s30, %s31
      %p45 = scmp.eq.s32.totalorder %s23, 1
      %p46 = por %p44, %p45
      %p48 = scmp.ne.s32.totalorder %s31, %s47
      %p49 = scmp.eq.s32.totalorder %s23, 0
      %p50 = por %p48, %p49
      %s51 = ssub.s32 %s17, %s24
      %p52 = scmp.eq.s32.totalorder %s51, 0
      %s54 = sadd.s32 %s53, 1
      %s55 = scalar_select %p52, %s53, %s54
      %p58 = pneg %p52
      %p59 = scmp.eq.s32.totalorder %s17, 1
      %p60 = por %p58, %p59
      %p61 = scmp.ne.s32.totalorder %s53, %s56
      %p62 = scmp.eq.s32.totalorder %s17, 0
      %p63 = por %p61, %p62
      %p64 = scmp.ne.s32.totalorder %s53, %s56
      %p65 = scmp.eq.s32.totalorder %s22, 1
      %p66 = por %p64, %p65
      %p67 = scmp.ne.s32.totalorder %s56, %s57
      %p68 = scmp.eq.s32.totalorder %s22, 0
      %p69 = por %p67, %p68
      %p70 = scmp.ne.s32.totalorder %s56, %s57
      %p71 = scmp.eq.s32.totalorder %s23, 1
      %p72 = por %p70, %p71
      %p74 = scmp.ne.s32.totalorder %s57, %s73
      %p75 = scmp.eq.s32.totalorder %s23, 0
      %p76 = por %p74, %p75
      %s77 = ssub.s32 %s17, %s24
      %p78 = scmp.eq.s32.totalorder %s77, 0
      %s80 = sadd.s32 %s79, 1
      %s81 = scalar_select %p78, %s79, %s80
      %p84 = pneg %p78
      %p85 = scmp.eq.s32.totalorder %s17, 1
      %p86 = por %p84, %p85
      %p87 = scmp.ne.s32.totalorder %s79, %s82
      %p88 = scmp.eq.s32.totalorder %s17, 0
      %p89 = por %p87, %p88
      %p90 = scmp.ne.s32.totalorder %s79, %s82
      %p91 = scmp.eq.s32.totalorder %s22, 1
      %p92 = por %p90, %p91
      %p93 = scmp.ne.s32.totalorder %s82, %s83
      %p94 = scmp.eq.s32.totalorder %s22, 0
      %p95 = por %p93, %p94
      %p96 = scmp.ne.s32.totalorder %s82, %s83
      %p97 = scmp.eq.s32.totalorder %s23, 1
      %p98 = por %p96, %p97
      %p100 = scmp.ne.s32.totalorder %s83, %s99
      %p101 = scmp.eq.s32.totalorder %s23, 0
      %p102 = por %p100, %p101
      %p103 = scmp.le.s32.totalorder 1, %s17
      %p104 = scmp.lt.s32.totalorder %s17, 3
      %p105 = pnand %p103, %p104
      %p106 = pneg %p105
      // Predicated region
      $region9: #{tpu_custom_call.1} parent=5 // pred_check
        _
      $region10: #{tpu_custom_call.1} parent=5 // pred_check_branch
        %108 = sbr.rel (%p105) target = $region12
      $region11: #{tpu_custom_call.1} parent=5 // pred_region
        %s109 = ssub.s32 %s17, 1
      $region12: #{tpu_custom_call.1} parent=5 // pred_fallthru
        _
      %p110 = scmp.lt.s32.totalorder %s17, 2
      // Predicated region
      $region13: #{tpu_custom_call.1} parent=5 // pred_check
        %p111 = pneg %p110
      $region14: #{tpu_custom_call.1} parent=5 // pred_check_branch
        %113 = sbr.rel (%p111) target = $region16
      $region15: #{tpu_custom_call.1} parent=5 // pred_region
        // Predicated region
        $region17: #{tpu_custom_call.1} parent=15 // pred_check
          %p114 = pneg %p37
        $region18: #{tpu_custom_call.1} parent=15 // pred_check_branch
          %116 = sbr.rel (%p114) target = $region20
        $region19: #{tpu_custom_call.1} parent=15 // pred_region
          %s117 = sand.u32 %s27, 1
          %s118 = scalar_lea.sflag [#allocation3], %s117
          %s119 = sand.u32 %s27, 1
          %s120 = smul.addr %s119, 8
          %s121 = scalar_lea.vmem [#allocation2], %s120
          %s123 = ssub.s32 128, 128
          %124 = vsyncadd %s118, %s123
          %s125 = smul.addr %s17, 128
          %s126 = scalar_lea.hbm %s0, %s125
          %s128 = sshll.u32 %s121, 4
          %s129 = int_to_ptr.vmem [resolvable:$true] %s128
          %131 = dma.hbm_to_vmem [thread:$0]  %s126, 128, %s129, %s118
        $region20: #{tpu_custom_call.1} parent=15 // pred_fallthru
          _
        // Predicated region
        $region21: #{tpu_custom_call.1} parent=15 // pred_check
          %p132 = pneg %p63
        $region22: #{tpu_custom_call.1} parent=15 // pred_check_branch
          %134 = sbr.rel (%p132) target = $region24
        $region23: #{tpu_custom_call.1} parent=15 // pred_region
          %s135 = sand.u32 %s53, 1
          %s136 = scalar_lea.sflag [#allocation6], %s135
          %s137 = sand.u32 %s53, 1
          %s138 = smul.addr %s137, 8
          %s139 = scalar_lea.vmem [#allocation5], %s138
          %s141 = ssub.s32 128, 128
          %142 = vsyncadd %s136, %s141
          %s143 = smul.addr %s17, 128
          %s144 = scalar_lea.hbm %s1, %s143
          %s146 = sshll.u32 %s139, 4
          %s147 = int_to_ptr.vmem [resolvable:$true] %s146
          %149 = dma.hbm_to_vmem [thread:$0]  %s144, 128, %s147, %s136
        $region24: #{tpu_custom_call.1} parent=15 // pred_fallthru
          _
      $region16: #{tpu_custom_call.1} parent=5 // pred_fallthru
        _
      %p150 = scmp.le.s32.totalorder 1, %s17
      %p151 = scmp.lt.s32.totalorder %s17, 3
      %p152 = pnand %p150, %p151
      %p153 = pneg %p152
      // Predicated region
      $region25: #{tpu_custom_call.1} parent=5 // pred_check
        _
      $region26: #{tpu_custom_call.1} parent=5 // pred_check_branch
        %155 = sbr.rel (%p152) target = $region28
      $region27: #{tpu_custom_call.1} parent=5 // pred_region
        %s156 = ssub.s32 %s17, 1
        %s157 = sand.u32 %s30, 1
        %s158 = scalar_lea.sflag [#allocation3], %s157
        %s159 = sand.u32 %s30, 1
        %s160 = smul.addr %s159, 8
        %s161 = scalar_lea.vmem [#allocation2], %s160
        // Predicated region
        $region29: #{tpu_custom_call.1} parent=27 // pred_check
          %p162 = pneg %p43
        $region30: #{tpu_custom_call.1} parent=27 // pred_check_branch
          %164 = sbr.rel (%p162) target = $region32
        $region31: #{tpu_custom_call.1} parent=27 // pred_region
          %165 = dma.done %s158, 128
        $region32: #{tpu_custom_call.1} parent=27 // pred_fallthru
          _
        %s166 = sand.u32 %s56, 1
        %s167 = scalar_lea.sflag [#allocation6], %s166
        %s168 = sand.u32 %s56, 1
        %s169 = smul.addr %s168, 8
        %s170 = scalar_lea.vmem [#allocation5], %s169
        // Predicated region
        $region33: #{tpu_custom_call.1} parent=27 // pred_check
          %p171 = pneg %p69
        $region34: #{tpu_custom_call.1} parent=27 // pred_check_branch
          %173 = sbr.rel (%p171) target = $region36
        $region35: #{tpu_custom_call.1} parent=27 // pred_region
          %174 = dma.done %s167, 128
        $region36: #{tpu_custom_call.1} parent=27 // pred_fallthru
          _
        %s175 = sand.u32 %s30, 1
        %s176 = scalar_lea.sflag [#allocation3], %s175
        %s177 = sand.u32 %s30, 1
        %s178 = smul.addr %s177, 8
        %s179 = scalar_lea.vmem [#allocation2], %s178
        %p180 = pneg %p43
        %p181 = pneg %p40
        %s182 = sand.u32 %s56, 1
        %s183 = scalar_lea.sflag [#allocation6], %s182
        %s184 = sand.u32 %s56, 1
        %s185 = smul.addr %s184, 8
        %s186 = scalar_lea.vmem [#allocation5], %s185
        %p187 = pneg %p69
        %p188 = pneg %p66
        %p189 = pneg %p95
        %p190 = pneg %p92
        %s191 = sand.u32 %s82, 1
        %s192 = scalar_lea.sflag [#allocation4], %s191
        %s193 = sand.u32 %s82, 1
        %s194 = smul.addr %s193, 8
        %s195 = scalar_lea.vmem [#allocation7], %s194
        %v196 = vld [vmem:[%s161] sm:$0xff]
        %v197 = vld [vmem:[%s170] sm:$0xff]
        %v198 = vadd.f32 %v196, %v197
        %199 = vst [vmem:[%s195] sm:$0xff] %v198
        %s200 = sand.u32 %s82, 1
        %s201 = scalar_lea.sflag [#allocation4], %s200
        %s202 = sand.u32 %s82, 1
        %s203 = smul.addr %s202, 8
        %s204 = scalar_lea.vmem [#allocation7], %s203
        // Predicated region
        $region37: #{tpu_custom_call.1} parent=27 // pred_check
          %p205 = pneg %p92
        $region38: #{tpu_custom_call.1} parent=27 // pred_check_branch
          %207 = sbr.rel (%p205) target = $region40
        $region39: #{tpu_custom_call.1} parent=27 // pred_region
          %s209 = ssub.s32 128, 128
          %210 = vsyncadd %s201, %s209
          %s211 = smul.addr %s22, 128
          %s212 = scalar_lea.hbm %s2, %s211
          %s214 = sshll.u32 %s204, 4
          %s215 = int_to_ptr.vmem [resolvable:$true] %s214
          %217 = dma.vmem_to_hbm [thread:$0]  %s215, 128, %s212, %s201
        $region40: #{tpu_custom_call.1} parent=27 // pred_fallthru
          _
      $region28: #{tpu_custom_call.1} parent=5 // pred_fallthru
        _
      %p218 = scmp.le.s32.totalorder 2, %s17
      // Predicated region
      $region41: #{tpu_custom_call.1} parent=5 // pred_check
        %p219 = pneg %p218
      $region42: #{tpu_custom_call.1} parent=5 // pred_check_branch
        %221 = sbr.rel (%p219) target = $region44
      $region43: #{tpu_custom_call.1} parent=5 // pred_region
        %s222 = ssub.s32 %s17, 2
        // Predicated region
        $region45: #{tpu_custom_call.1} parent=43 // pred_check
          %p223 = pneg %p98
        $region46: #{tpu_custom_call.1} parent=43 // pred_check_branch
          %225 = sbr.rel (%p223) target = $region48
        $region47: #{tpu_custom_call.1} parent=43 // pred_region
          %s226 = sand.u32 %s83, 1
          %s227 = scalar_lea.sflag [#allocation4], %s226
          %s228 = sand.u32 %s83, 1
          %s229 = smul.addr %s228, 8
          %s230 = scalar_lea.vmem [#allocation7], %s229
          %231 = dma.done %s227, 128
        $region48: #{tpu_custom_call.1} parent=43 // pred_fallthru
          _
      $region44: #{tpu_custom_call.1} parent=5 // pred_fallthru
        _
    $region6: #{tpu_custom_call.1} parent=1 // loop_footer
      %s21 = sadd.s32 1, %s17
    $region7: #{tpu_custom_call.1} parent=1 // loop_footer_branch
      %16 = sbr.rel target = $region3
    $region8: #{tpu_custom_call.1} parent=1 // loop_exit
      _
    %232 = vsyncpa [#allocation3], 1
    %s233 = scalar_lea.sflag [#allocation3], 1
    %234 = vsyncpa %s233, 1
    %235 = vsyncpa [#allocation6], 1
    %s236 = scalar_lea.sflag [#allocation6], 1
    %237 = vsyncpa %s236, 1
    %238 = vsyncpa [#allocation4], 1
    %s239 = scalar_lea.sflag [#allocation4], 1
    %240 = vsyncpa %s239, 1

</llo_original>
